<compile_context>
chip_gen: v7x
topology: tpu7x:2x2x1
jax: 0.10.0
libtpu: 0.0.40
codegen_flags: <defaults>
</compile_context>

<pallas_src>
import math

import jax
import jax.numpy as jnp
from jax.experimental import pallas as pl
from jax.experimental.pallas import tpu as pltpu

HALF_LOG_2PI = 0.5 * math.log(2.0 * math.pi)


def _vae_neg_elbo_kernel(xe_ref, p128_ref, p256_ref, out_ref):
    """xe: (B, D+H) = [x | eps_padded]; p128: 128-col param slab; p256: 256-col slab."""
    f32 = jnp.float32
    H = p128_ref.shape[1]          # hidden width == padded latent width (128)
    D = p256_ref.shape[1]          # flattened image size (256)
    B = xe_ref.shape[0]

    x = xe_ref[:, :D]              # (B, D)   lane-aligned slice (D % 128 == 0)
    eps = xe_ref[:, D:]            # (B, H)   zero beyond true latent dim M

    # ---- static, 8-aligned row offsets into the packed 128-column slab ----
    r = 0
    w1 = p128_ref[r:r + D, :]; r += D          # (D, H)
    w2 = p128_ref[r:r + H, :]; r += H          # (H, H)
    w3_mu = p128_ref[r:r + H, :]; r += H       # (H, H)   cols >= M are zero
    w3_ls = p128_ref[r:r + H, :]; r += H       # (H, H)   cols >= M are zero
    b1 = p128_ref[r:r + 1, :]; r += 8          # (1, H)
    b2 = p128_ref[r:r + 1, :]; r += 8
    b3_mu = p128_ref[r:r + 1, :]; r += 8
    b3_ls = p128_ref[r:r + 1, :]; r += 8
    v1 = p128_ref[r:r + H, :]; r += H          # (H, H)   rows >= M are zero
    v2 = p128_ref[r:r + H, :]; r += H          # (H, H)
    c1 = p128_ref[r:r + 1, :]; r += 8
    c2 = p128_ref[r:r + 1, :]; r += 8
    v3 = p256_ref[:H, :]                       # (H, D)
    c3 = p256_ref[H:H + 1, :]                  # (1, D)

    # ---- encoder MLP (two output heads -> no non-128-aligned lane slicing) ----
    h1 = jnp.maximum(jnp.dot(x, w1, preferred_element_type=f32) + b1, 0.0)
    h2 = jnp.maximum(jnp.dot(h1, w2, preferred_element_type=f32) + b2, 0.0)
    mu = jnp.dot(h2, w3_mu, preferred_element_type=f32) + b3_mu        # pad lanes == 0
    log_std = jnp.dot(h2, w3_ls, preferred_element_type=f32) + b3_ls   # pad lanes == 0

    # ---- reparameterized sample z = q.rsample(); pad lanes: 0 + exp(0)*0 = 0 ----
    z = mu + jnp.exp(log_std) * eps

    # ---- selected decoder MLP ----
    d1 = jnp.maximum(jnp.dot(z, v1, preferred_element_type=f32) + c1, 0.0)
    d2 = jnp.maximum(jnp.dot(d1, v2, preferred_element_type=f32) + c2, 0.0)
    logits = jnp.dot(d2, v3, preferred_element_type=f32) + c3          # (B, D)

    # ---- Bernoulli log p(x|z) = sum x*l - softplus(l)  (single transcendental pass) ----
    log_px = jnp.sum(x * logits - jnp.logaddexp(0.0, logits))

    # ---- fused log p(z) - log q(z|x); 0.5*log(2*pi) terms cancel exactly and the
    #      padded lanes contribute exactly zero (eps=0, z=0, log_std=0) ----
    log_pz_minus_qz = jnp.sum(0.5 * eps * eps - 0.5 * z * z + log_std)

    out_ref[0, 0] = -(log_px + log_pz_minus_qz) * (1.0 / B)


def pack_vae_params(enc_params, dec_params):
    """Pack encoder + selected-decoder params into two zero-padded VMEM-friendly slabs."""
    w1, b1, w2, b2, w3, b3 = enc_params      # w3: (H, 2M), b3: (1, 2M)
    v1, c1, v2, c2, v3, c3 = dec_params      # v1: (M, H),  v3: (H, D)
    D, H = w1.shape
    M = v1.shape[0]

    def pad_cols(a, n):
        return jnp.pad(a.astype(jnp.float32), ((0, 0), (0, n - a.shape[1])))

    def pad_rows(a, n):
        return jnp.pad(a.astype(jnp.float32), ((0, n - a.shape[0]), (0, 0)))

    def bias_block(b, width):                # (1, F) -> (8, width), zero padded
        return pad_rows(pad_cols(b, width), 8)

    p128 = jnp.concatenate([
        w1.astype(jnp.float32),              # rows [0, D)
        w2.astype(jnp.float32),              # rows [D, D+H)
        pad_cols(w3[:, :M], H),              # w3_mu      (H, H)
        pad_cols(w3[:, M:], H),              # w3_logstd  (H, H)
        bias_block(b1, H),
        bias_block(b2, H),
        bias_block(b3[:, :M], H),
        bias_block(b3[:, M:], H),
        pad_rows(v1, H),                     # v1 (M,H) -> (H,H)
        v2.astype(jnp.float32),
        bias_block(c1, H),
        bias_block(c2, H),
    ], axis=0)                               # (D + 7H + 48, H) = (944, 128) f32

    p256 = jnp.concatenate([
        v3.astype(jnp.float32),              # (H, D)
        bias_block(c3, D),
    ], axis=0)                               # (H + 8, D) = (136, 256) f32
    return p128, p256


def vae_ensemble_forward(x_img, eps, p128, p256):
    """x_img: (B,1,h,w) NCHW; eps: (B,M) reparam noise; p128/p256: packed params."""
    B = x_img.shape[0]
    Hdim = p128.shape[1]
    x_flat = x_img.reshape(B, -1).astype(jnp.float32)
    eps_pad = jnp.pad(eps.astype(jnp.float32), ((0, 0), (0, Hdim - eps.shape[1])))
    xe = jnp.concatenate([x_flat, eps_pad], axis=1)     # (B, D + H) -> one DMA

    vmem = pl.BlockSpec(memory_space=pltpu.MemorySpace.VMEM)
    smem = pl.BlockSpec(memory_space=pltpu.MemorySpace.SMEM)
    # No grid: whole problem (<1 MiB) fits in one VMEM block. At large batch, tile the
    # batch with a grid ("parallel") + pl.when-accumulated partial sums instead.
    out = pl.pallas_call(
        _vae_neg_elbo_kernel,
        out_shape=jax.ShapeDtypeStruct((1, 1), jnp.float32),
        in_specs=[vmem, vmem, vmem],
        out_specs=smem,
    )(xe, p128, p256)
    return out[0, 0]


def _reference(x_img, eps, enc_params, dec_params):
    """Pure-JAX reference matching the PyTorch semantics (unfused, f32)."""
    w1, b1, w2, b2, w3, b3 = enc_params
    v1, c1, v2, c2, v3, c3 = dec_params
    B = x_img.shape[0]
    x = x_img.reshape(B, -1).astype(jnp.float32)
    M = eps.shape[-1]
    h1 = jax.nn.relu(x @ w1 + b1)
    h2 = jax.nn.relu(h1 @ w2 + b2)
    enc = h2 @ w3 + b3
    mu, log_std = enc[:, :M], enc[:, M:]
    std = jnp.exp(log_std)
    z = mu + std * eps
    d1 = jax.nn.relu(z @ v1 + c1)
    d2 = jax.nn.relu(d1 @ v2 + c2)
    logits = d2 @ v3 + c3
    log_px = -jnp.sum(x * jax.nn.softplus(-logits) + (1 - x) * jax.nn.softplus(logits), axis=-1)
    log_qz = jnp.sum(-0.5 * eps ** 2 - log_std - HALF_LOG_2PI, axis=-1)
    log_pz = jnp.sum(-0.5 * z ** 2 - HALF_LOG_2PI, axis=-1)
    return -jnp.mean(log_px - log_qz + log_pz)


def _init_mlp(key, dims, scale=0.05):
    """Deterministic Gaussian init. Returns (W, b(1,F)) interleaved."""
    params = []
    for din, dout in zip(dims[:-1], dims[1:]):
        kw, key = jax.random.split(key)
        w = (scale * jax.random.normal(kw, (din, dout))).astype(jnp.float32)
        b = jnp.zeros((1, dout), jnp.float32)
        params += [w, b]
    return tuple(params)


if __name__ == "__main__":
    # Small shapes consistent with the module: B=8 images of 1x16x16 -> D=256,
    # hidden H=128, latent M=32, ensemble of 3 decoders.
    B, D, H, M = 8, 256, 128, 32
    NUM_DECODERS = 3

    key = jax.random.PRNGKey(0)
    k_x, k_eps, k_sel, k_enc, k_dec = jax.random.split(key, 5)

    # Binarized "image" data, NCHW like PyTorch conv inputs.
    x_img = (jax.random.uniform(k_x, (B, 1, 16, 16)) > 0.5).astype(jnp.float32)
    # Reparameterization noise for q.rsample().
    eps = jax.random.normal(k_eps, (B, M)).astype(jnp.float32)

    # Encoder: D -> H -> H -> 2M
    enc_params = _init_mlp(k_enc, (D, H, H, 2 * M))

    # Ensemble of decoders: M -> H -> H -> D
    dec_keys = jax.random.split(k_dec, NUM_DECODERS)
    decoders = [_init_mlp(dk, (M, H, H, D)) for dk in dec_keys]

    # torch.randint(0, num_decoder, (1,)).item() -> host-side random decoder pick.
    # TODO(synk): could move on-device via PrefetchScalarGridSpec(num_scalar_prefetch=1)
    #             indexing a stacked (NUM_DECODERS, ...) weight slab.
    dec_idx = int(jax.random.randint(k_sel, (), 0, NUM_DECODERS))
    dec_params = decoders[dec_idx]

    p128, p256 = pack_vae_params(enc_params, dec_params)

    neg_elbo = vae_ensemble_forward(x_img, eps, p128, p256)
    neg_elbo = jax.block_until_ready(neg_elbo)

    ref = _reference(x_img, eps, enc_params, dec_params)
    assert jnp.allclose(neg_elbo, ref, rtol=1e-4, atol=1e-3), (neg_elbo, ref)

    print("KERNEL_OK")
</pallas_src>

<mosaic_0001>
module attributes {stable_mosaic.version = 11 : i64} {
  func.func @_vae_neg_elbo_kernel(%arg0: memref<8x384xf32, #tpu.memory_space<vmem>>, %arg1: memref<944x128xf32, #tpu.memory_space<vmem>>, %arg2: memref<136x256xf32, #tpu.memory_space<vmem>>, %arg3: memref<1x1xf32, #tpu.memory_space<smem>>) attributes {dimension_semantics = [], scalar_prefetch = 0 : i64, scratch_operands = 0 : i64, tpu.core_type = #tpu.core_type<tc>} {
    %c0 = arith.constant 0 : index
    %c0_0 = arith.constant 0 : index
    %0 = vector.load %arg0[%c0, %c0_0] : memref<8x384xf32, #tpu.memory_space<vmem>>, vector<8x256xf32>
    %c0_1 = arith.constant 0 : index
    %c256 = arith.constant 256 : index
    %1 = vector.load %arg0[%c0_1, %c256] : memref<8x384xf32, #tpu.memory_space<vmem>>, vector<8x128xf32>
    %c0_2 = arith.constant 0 : index
    %c0_3 = arith.constant 0 : index
    %2 = vector.load %arg1[%c0_2, %c0_3] : memref<944x128xf32, #tpu.memory_space<vmem>>, vector<256x128xf32>
    %c256_4 = arith.constant 256 : index
    %c0_5 = arith.constant 0 : index
    %3 = vector.load %arg1[%c256_4, %c0_5] : memref<944x128xf32, #tpu.memory_space<vmem>>, vector<128x128xf32>
    %c384 = arith.constant 384 : index
    %c0_6 = arith.constant 0 : index
    %4 = vector.load %arg1[%c384, %c0_6] : memref<944x128xf32, #tpu.memory_space<vmem>>, vector<128x128xf32>
    %c512 = arith.constant 512 : index
    %c0_7 = arith.constant 0 : index
    %5 = vector.load %arg1[%c512, %c0_7] : memref<944x128xf32, #tpu.memory_space<vmem>>, vector<128x128xf32>
    %c640 = arith.constant 640 : index
    %c0_8 = arith.constant 0 : index
    %6 = vector.load %arg1[%c640, %c0_8] : memref<944x128xf32, #tpu.memory_space<vmem>>, vector<1x128xf32>
    %c648 = arith.constant 648 : index
    %c0_9 = arith.constant 0 : index
    %7 = vector.load %arg1[%c648, %c0_9] : memref<944x128xf32, #tpu.memory_space<vmem>>, vector<1x128xf32>
    %c656 = arith.constant 656 : index
    %c0_10 = arith.constant 0 : index
    %8 = vector.load %arg1[%c656, %c0_10] : memref<944x128xf32, #tpu.memory_space<vmem>>, vector<1x128xf32>
    %c664 = arith.constant 664 : index
    %c0_11 = arith.constant 0 : index
    %9 = vector.load %arg1[%c664, %c0_11] : memref<944x128xf32, #tpu.memory_space<vmem>>, vector<1x128xf32>
    %c672 = arith.constant 672 : index
    %c0_12 = arith.constant 0 : index
    %10 = vector.load %arg1[%c672, %c0_12] : memref<944x128xf32, #tpu.memory_space<vmem>>, vector<128x128xf32>
    %c800 = arith.constant 800 : index
    %c0_13 = arith.constant 0 : index
    %11 = vector.load %arg1[%c800, %c0_13] : memref<944x128xf32, #tpu.memory_space<vmem>>, vector<128x128xf32>
    %c928 = arith.constant 928 : index
    %c0_14 = arith.constant 0 : index
    %12 = vector.load %arg1[%c928, %c0_14] : memref<944x128xf32, #tpu.memory_space<vmem>>, vector<1x128xf32>
    %c936 = arith.constant 936 : index
    %c0_15 = arith.constant 0 : index
    %13 = vector.load %arg1[%c936, %c0_15] : memref<944x128xf32, #tpu.memory_space<vmem>>, vector<1x128xf32>
    %c0_16 = arith.constant 0 : index
    %c0_17 = arith.constant 0 : index
    %14 = vector.load %arg2[%c0_16, %c0_17] : memref<136x256xf32, #tpu.memory_space<vmem>>, vector<128x256xf32>
    %c128 = arith.constant 128 : index
    %c0_18 = arith.constant 0 : index
    %15 = vector.load %arg2[%c128, %c0_18] : memref<136x256xf32, #tpu.memory_space<vmem>>, vector<1x256xf32>
    %cst = arith.constant dense<0.000000e+00> : vector<8x128xf32>
    %16 = tpu.matmul %0, %2, %cst {dimension_numbers = #tpu.dot_dimension_numbers<[1], [0], [0], [1], [0, 0, 1, 1], [], []>} : vector<8x256xf32>, vector<256x128xf32>, vector<8x128xf32> -> vector<8x128xf32>
    %17 = vector.broadcast %6 : vector<1x128xf32> to vector<8x128xf32>
    %18 = arith.addf %16, %17 : vector<8x128xf32>
    %cst_19 = arith.constant 0.000000e+00 : f32
    %19 = vector.broadcast %cst_19 : f32 to vector<8x128xf32>
    %20 = arith.maximumf %18, %19 : vector<8x128xf32>
    %cst_20 = arith.constant dense<0.000000e+00> : vector<8x128xf32>
    %21 = tpu.matmul %20, %3, %cst_20 {dimension_numbers = #tpu.dot_dimension_numbers<[1], [0], [0], [1], [0, 0, 1, 1], [], []>} : vector<8x128xf32>, vector<128x128xf32>, vector<8x128xf32> -> vector<8x128xf32>
    %22 = vector.broadcast %7 : vector<1x128xf32> to vector<8x128xf32>
    %23 = arith.addf %21, %22 : vector<8x128xf32>
    %cst_21 = arith.constant 0.000000e+00 : f32
    %24 = vector.broadcast %cst_21 : f32 to vector<8x128xf32>
    %25 = arith.maximumf %23, %24 : vector<8x128xf32>
    %cst_22 = arith.constant dense<0.000000e+00> : vector<8x128xf32>
    %26 = tpu.matmul %25, %4, %cst_22 {dimension_numbers = #tpu.dot_dimension_numbers<[1], [0], [0], [1], [0, 0, 1, 1], [], []>} : vector<8x128xf32>, vector<128x128xf32>, vector<8x128xf32> -> vector<8x128xf32>
    %27 = vector.broadcast %8 : vector<1x128xf32> to vector<8x128xf32>
    %28 = arith.addf %26, %27 : vector<8x128xf32>
    %cst_23 = arith.constant dense<0.000000e+00> : vector<8x128xf32>
    %29 = tpu.matmul %25, %5, %cst_23 {dimension_numbers = #tpu.dot_dimension_numbers<[1], [0], [0], [1], [0, 0, 1, 1], [], []>} : vector<8x128xf32>, vector<128x128xf32>, vector<8x128xf32> -> vector<8x128xf32>
    %30 = vector.broadcast %9 : vector<1x128xf32> to vector<8x128xf32>
    %31 = arith.addf %29, %30 : vector<8x128xf32>
    %32 = math.exp %31 : vector<8x128xf32>
    %33 = arith.mulf %32, %1 : vector<8x128xf32>
    %34 = arith.addf %28, %33 : vector<8x128xf32>
    %cst_24 = arith.constant dense<0.000000e+00> : vector<8x128xf32>
    %35 = tpu.matmul %34, %10, %cst_24 {dimension_numbers = #tpu.dot_dimension_numbers<[1], [0], [0], [1], [0, 0, 1, 1], [], []>} : vector<8x128xf32>, vector<128x128xf32>, vector<8x128xf32> -> vector<8x128xf32>
    %36 = vector.broadcast %12 : vector<1x128xf32> to vector<8x128xf32>
    %37 = arith.addf %35, %36 : vector<8x128xf32>
    %cst_25 = arith.constant 0.000000e+00 : f32
    %38 = vector.broadcast %cst_25 : f32 to vector<8x128xf32>
    %39 = arith.maximumf %37, %38 : vector<8x128xf32>
    %cst_26 = arith.constant dense<0.000000e+00> : vector<8x128xf32>
    %40 = tpu.matmul %39, %11, %cst_26 {dimension_numbers = #tpu.dot_dimension_numbers<[1], [0], [0], [1], [0, 0, 1, 1], [], []>} : vector<8x128xf32>, vector<128x128xf32>, vector<8x128xf32> -> vector<8x128xf32>
    %41 = vector.broadcast %13 : vector<1x128xf32> to vector<8x128xf32>
    %42 = arith.addf %40, %41 : vector<8x128xf32>
    %cst_27 = arith.constant 0.000000e+00 : f32
    %43 = vector.broadcast %cst_27 : f32 to vector<8x128xf32>
    %44 = arith.maximumf %42, %43 : vector<8x128xf32>
    %cst_28 = arith.constant dense<0.000000e+00> : vector<8x256xf32>
    %45 = tpu.matmul %44, %14, %cst_28 {dimension_numbers = #tpu.dot_dimension_numbers<[1], [0], [0], [1], [0, 0, 1, 1], [], []>} : vector<8x128xf32>, vector<128x256xf32>, vector<8x256xf32> -> vector<8x256xf32>
    %46 = vector.broadcast %15 : vector<1x256xf32> to vector<8x256xf32>
    %47 = arith.addf %45, %46 : vector<8x256xf32>
    %48 = arith.mulf %0, %47 : vector<8x256xf32>
    %cst_29 = arith.constant 0.000000e+00 : f32
    %49 = vector.broadcast %cst_29 : f32 to vector<8x256xf32>
    %50 = arith.maximumf %49, %47 : vector<8x256xf32>
    %51 = vector.broadcast %cst_29 : f32 to vector<8x256xf32>
    %52 = arith.subf %51, %47 : vector<8x256xf32>
    %53 = arith.cmpf one, %52, %52 : vector<8x256xf32>
    %54 = vector.broadcast %cst_29 : f32 to vector<8x256xf32>
    %55 = arith.addf %54, %47 : vector<8x256xf32>
    %56 = math.absf %52 : vector<8x256xf32>
    %cst_30 = arith.constant 0.000000e+00 : f32
    %57 = vector.broadcast %cst_30 : f32 to vector<8x256xf32>
    %58 = arith.subf %57, %56 : vector<8x256xf32>
    %59 = math.exp %58 : vector<8x256xf32>
    %60 = math.log1p %59 : vector<8x256xf32>
    %61 = arith.addf %50, %60 : vector<8x256xf32>
    %62 = arith.select %53, %55, %61 : vector<8x256xi1>, vector<8x256xf32>
    %63 = arith.subf %48, %62 : vector<8x256xf32>
    %64 = vector.shape_cast %63 : vector<8x256xf32> to vector<1x8x256xf32>
    %cst_31 = arith.constant dense<0.000000e+00> : vector<1xf32>
    %65 = vector.multi_reduction <add>, %64, %cst_31 [1, 2] : vector<1x8x256xf32> to vector<1xf32>
    %66 = vector.shape_cast %65 : vector<1xf32> to vector<1x1x1xf32>
    %67 = vector.extract %66[0, 0, 0] : f32 from vector<1x1x1xf32>
    %cst_32 = arith.constant 5.000000e-01 : f32
    %68 = vector.broadcast %cst_32 : f32 to vector<8x128xf32>
    %69 = arith.mulf %68, %1 : vector<8x128xf32>
    %70 = arith.mulf %69, %1 : vector<8x128xf32>
    %cst_33 = arith.constant 5.000000e-01 : f32
    %71 = vector.broadcast %cst_33 : f32 to vector<8x128xf32>
    %72 = arith.mulf %71, %34 : vector<8x128xf32>
    %73 = arith.mulf %72, %34 : vector<8x128xf32>
    %74 = arith.subf %70, %73 : vector<8x128xf32>
    %75 = arith.addf %74, %31 : vector<8x128xf32>
    %76 = vector.shape_cast %75 : vector<8x128xf32> to vector<1x8x128xf32>
    %cst_34 = arith.constant dense<0.000000e+00> : vector<1xf32>
    %77 = vector.multi_reduction <add>, %76, %cst_34 [1, 2] : vector<1x8x128xf32> to vector<1xf32>
    %78 = vector.shape_cast %77 : vector<1xf32> to vector<1x1x1xf32>
    %79 = vector.extract %78[0, 0, 0] : f32 from vector<1x1x1xf32>
    %80 = arith.addf %67, %79 : f32
    %cst_35 = arith.constant 0.000000e+00 : f32
    %81 = arith.subf %cst_35, %80 : f32
    %cst_36 = arith.constant 1.250000e-01 : f32
    %82 = arith.mulf %81, %cst_36 : f32
    %c0_37 = arith.constant 0 : index
    %c0_38 = arith.constant 0 : index
    %83 = memref.load %arg3[%c0_37, %c0_38] : memref<1x1xf32, #tpu.memory_space<smem>>
    memref.store %82, %arg3[%c0_37, %c0_38] : memref<1x1xf32, #tpu.memory_space<smem>>
    return
  }
}

</mosaic_0001>

<llo_original>
// kernel: tpu_custom_call.1
$region0: #{tpu_custom_call.1}
  #allocation0 [shape = 'u32[]', space=smem, size = 0x4, offset = 0x4, fixed_abs, tag = 'smem constant byte address 0x4 - core index']
  #allocation1 [shape = 'u32[144,128]{1,0:T(1,128)}', space=vmem, size = 0x12000, scoped, tag = 'internal scratch']
  %s0 = inlined_call_operand.hbm [shape: f32[8,384], index: 0, kind: input, shape index: {}]
  %s1 = inlined_call_operand.hbm [shape: f32[944,128], index: 1, kind: input, shape index: {}]
  %s2 = inlined_call_operand.hbm [shape: f32[136,256], index: 2, kind: input, shape index: {}]
  %s3 = inlined_call_operand.hbm [shape: f32[1,1], index: 3, kind: output, shape index: {}]
  %s4 = sld [smem:[#allocation0]]
  $region34: #{tpu_custom_call.1} parent=0
    _
  %s6 = ssub.s32 1, %s4
  %s7 = scalar_select 0, %s6, %s4
  $region1: #{tpu_custom_call.1} parent=0
    #allocation2 [shape = 'u8[12288]{0}', space=vmem, size = 0x3000, scoped, tag = 'input window, operand 0, single buffered']
    #allocation3 [shape = 's32[1]{0}', space=sflag, size = 0x4, scoped, tag = 'scoped memory for tpu_custom_call.1']
    #allocation4 [shape = 's32[1]{0}', space=sflag, size = 0x4, scoped, tag = 'scoped memory for tpu_custom_call.1']
    #allocation5 [shape = 'u8[483328]{0}', space=vmem, size = 0x76000, scoped, tag = 'input window, operand 1, single buffered']
    #allocation6 [shape = 's32[1]{0}', space=sflag, size = 0x4, scoped, tag = 'scoped memory for tpu_custom_call.1']
    #allocation7 [shape = 'u8[139264]{0}', space=vmem, size = 0x22000, scoped, tag = 'input window, operand 2, single buffered']
    #allocation8 [shape = 'u8[512]{0}', space=smem, size = 0x200, scoped, tag = 'output window, operand 0, single buffered']
    %8 = vsyncpa [#allocation3], 0
    %9 = vsyncpa [#allocation6], 0
    %10 = vsyncpa [#allocation4], 0
    // Predicated region
    $region2: #{tpu_custom_call.1} parent=1 // pred_check
      _
    $region3: #{tpu_custom_call.1} parent=1 // pred_check_branch
      %12 = sbr.rel (0) target = $region5
    $region4: #{tpu_custom_call.1} parent=1 // pred_region
      %s14 = ssub.s32 384, 384
      %15 = vsyncadd [#allocation3], %s14
      %s17 = sshll.u32 [#allocation2], 4
      %s18 = int_to_ptr.vmem [resolvable:$true] %s17
      %20 = dma.hbm_to_vmem [thread:$0]  %s0, 384, %s18, [#allocation3]
    $region5: #{tpu_custom_call.1} parent=1 // pred_fallthru
      _
    // Predicated region
    $region6: #{tpu_custom_call.1} parent=1 // pred_check
      _
    $region7: #{tpu_custom_call.1} parent=1 // pred_check_branch
      %22 = sbr.rel (0) target = $region9
    $region8: #{tpu_custom_call.1} parent=1 // pred_region
      %s24 = ssub.s32 15104, 15104
      %25 = vsyncadd [#allocation6], %s24
      %s26 = sshll.u32 [#allocation5], 4
      %s27 = int_to_ptr.vmem [resolvable:$true] %s26
      %32 = dma.hbm_to_vmem [thread:$0]  %s1, 15104, %s27, [#allocation6], 128, 128, 8
    $region9: #{tpu_custom_call.1} parent=1 // pred_fallthru
      _
    // Predicated region
    $region10: #{tpu_custom_call.1} parent=1 // pred_check
      _
    $region11: #{tpu_custom_call.1} parent=1 // pred_check_branch
      %34 = sbr.rel (0) target = $region13
    $region12: #{tpu_custom_call.1} parent=1 // pred_region
      %s36 = ssub.s32 4352, 4352
      %37 = vsyncadd [#allocation6], %s36
      %s38 = sshll.u32 [#allocation7], 4
      %s39 = int_to_ptr.vmem [resolvable:$true] %s38
      %44 = dma.hbm_to_vmem [thread:$0]  %s2, 4352, %s39, [#allocation6], 256, 256, 16
    $region13: #{tpu_custom_call.1} parent=1 // pred_fallthru
      _
    // Predicated region
    $region14: #{tpu_custom_call.1} parent=1 // pred_check
      _
    $region15: #{tpu_custom_call.1} parent=1 // pred_check_branch
      %46 = sbr.rel (0) target = $region17
    $region16: #{tpu_custom_call.1} parent=1 // pred_region
      %47 = dma.done [#allocation3], 384
    $region17: #{tpu_custom_call.1} parent=1 // pred_fallthru
      _
    // Predicated region
    $region18: #{tpu_custom_call.1} parent=1 // pred_check
      _
    $region19: #{tpu_custom_call.1} parent=1 // pred_check_branch
      %49 = sbr.rel (0) target = $region21
    $region20: #{tpu_custom_call.1} parent=1 // pred_region
      %50 = dma.done [#allocation6], 15104
    $region21: #{tpu_custom_call.1} parent=1 // pred_fallthru
      _
    // Predicated region
    $region22: #{tpu_custom_call.1} parent=1 // pred_check
      _
    $region23: #{tpu_custom_call.1} parent=1 // pred_check_branch
      %52 = sbr.rel (0) target = $region25
    $region24: #{tpu_custom_call.1} parent=1 // pred_region
      %53 = dma.done [#allocation6], 4352
    $region25: #{tpu_custom_call.1} parent=1 // pred_fallthru
      _
    %v54 = vld [vmem:[#allocation2] sm:$0xff]
    %v55 = vld [vmem:[#allocation2 + $0x8] sm:$0xff]
    %v56 = vld [vmem:[#allocation2 + $0x10] sm:$0xff]
    %v57 = vld [vmem:[#allocation5] sm:$0xff]
    %v58 = vld [vmem:[#allocation5 + $0x8] sm:$0xff]
    %v59 = vld [vmem:[#allocation5 + $0x10] sm:$0xff]
    %v60 = vld [vmem:[#allocation5 + $0x18] sm:$0xff]
    %v61 = vld [vmem:[#allocation5 + $0x20] sm:$0xff]
    %v62 = vld [vmem:[#allocation5 + $0x28] sm:$0xff]
    %v63 = vld [vmem:[#allocation5 + $0x30] sm:$0xff]
    %v64 = vld [vmem:[#allocation5 + $0x38] sm:$0xff]
    %v65 = vld [vmem:[#allocation5 + $0x40] sm:$0xff]
    %v66 = vld [vmem:[#allocation5 + $0x48] sm:$0xff]
    %v67 = vld [vmem:[#allocation5 + $0x50] sm:$0xff]
    %v68 = vld [vmem:[#allocation5 + $0x58] sm:$0xff]
    %v69 = vld [vmem:[#allocation5 + $0x60] sm:$0xff]
    %v70 = vld [vmem:[#allocation5 + $0x68] sm:$0xff]
    %v71 = vld [vmem:[#allocation5 + $0x70] sm:$0xff]
    %v72 = vld [vmem:[#allocation5 + $0x78] sm:$0xff]
    %v73 = vld [vmem:[#allocation5 + $0x80] sm:$0xff]
    %v74 = vld [vmem:[#allocation5 + $0x88] sm:$0xff]
    %v75 = vld [vmem:[#allocation5 + $0x90] sm:$0xff]
    %v76 = vld [vmem:[#allocation5 + $0x98] sm:$0xff]
    %v77 = vld [vmem:[#allocation5 + $0xa0] sm:$0xff]
    %v78 = vld [vmem:[#allocation5 + $0xa8] sm:$0xff]
    %v79 = vld [vmem:[#allocation5 + $0xb0] sm:$0xff]
    %v80 = vld [vmem:[#allocation5 + $0xb8] sm:$0xff]
    %v81 = vld [vmem:[#allocation5 + $0xc0] sm:$0xff]
    %v82 = vld [vmem:[#allocation5 + $0xc8] sm:$0xff]
    %v83 = vld [vmem:[#allocation5 + $0xd0] sm:$0xff]
    %v84 = vld [vmem:[#allocation5 + $0xd8] sm:$0xff]
    %v85 = vld [vmem:[#allocation5 + $0xe0] sm:$0xff]
    %v86 = vld [vmem:[#allocation5 + $0xe8] sm:$0xff]
    %v87 = vld [vmem:[#allocation5 + $0xf0] sm:$0xff]
    %v88 = vld [vmem:[#allocation5 + $0xf8] sm:$0xff]
    %v89 = vld [vmem:[#allocation5 + $0x100] sm:$0xff]
    %v90 = vld [vmem:[#allocation5 + $0x108] sm:$0xff]
    %v91 = vld [vmem:[#allocation5 + $0x110] sm:$0xff]
    %v92 = vld [vmem:[#allocation5 + $0x118] sm:$0xff]
    %v93 = vld [vmem:[#allocation5 + $0x120] sm:$0xff]
    %v94 = vld [vmem:[#allocation5 + $0x128] sm:$0xff]
    %v95 = vld [vmem:[#allocation5 + $0x130] sm:$0xff]
    %v96 = vld [vmem:[#allocation5 + $0x138] sm:$0xff]
    %v97 = vld [vmem:[#allocation5 + $0x140] sm:$0xff]
    %v98 = vld [vmem:[#allocation5 + $0x148] sm:$0xff]
    %v99 = vld [vmem:[#allocation5 + $0x150] sm:$0xff]
    %v100 = vld [vmem:[#allocation5 + $0x158] sm:$0xff]
    %v101 = vld [vmem:[#allocation5 + $0x160] sm:$0xff]
    %v102 = vld [vmem:[#allocation5 + $0x168] sm:$0xff]
    %v103 = vld [vmem:[#allocation5 + $0x170] sm:$0xff]
    %v104 = vld [vmem:[#allocation5 + $0x178] sm:$0xff]
    %v105 = vld [vmem:[#allocation5 + $0x180] sm:$0xff]
    %v106 = vld [vmem:[#allocation5 + $0x188] sm:$0xff]
    %v107 = vld [vmem:[#allocation5 + $0x190] sm:$0xff]
    %v108 = vld [vmem:[#allocation5 + $0x198] sm:$0xff]
    %v109 = vld [vmem:[#allocation5 + $0x1a0] sm:$0xff]
    %v110 = vld [vmem:[#allocation5 + $0x1a8] sm:$0xff]
    %v111 = vld [vmem:[#allocation5 + $0x1b0] sm:$0xff]
    %v112 = vld [vmem:[#allocation5 + $0x1b8] sm:$0xff]
    %v113 = vld [vmem:[#allocation5 + $0x1c0] sm:$0xff]
    %v114 = vld [vmem:[#allocation5 + $0x1c8] sm:$0xff]
    %v115 = vld [vmem:[#allocation5 + $0x1d0] sm:$0xff]
    %v116 = vld [vmem:[#allocation5 + $0x1d8] sm:$0xff]
    %v117 = vld [vmem:[#allocation5 + $0x1e0] sm:$0xff]
    %v118 = vld [vmem:[#allocation5 + $0x1e8] sm:$0xff]
    %v119 = vld [vmem:[#allocation5 + $0x1f0] sm:$0xff]
    %v120 = vld [vmem:[#allocation5 + $0x1f8] sm:$0xff]
    %v121 = vld [vmem:[#allocation5 + $0x200] sm:$0xff]
    %v122 = vld [vmem:[#allocation5 + $0x208] sm:$0xff]
    %v123 = vld [vmem:[#allocation5 + $0x210] sm:$0xff]
    %v124 = vld [vmem:[#allocation5 + $0x218] sm:$0xff]
    %v125 = vld [vmem:[#allocation5 + $0x220] sm:$0xff]
    %v126 = vld [vmem:[#allocation5 + $0x228] sm:$0xff]
    %v127 = vld [vmem:[#allocation5 + $0x230] sm:$0xff]
    %v128 = vld [vmem:[#allocation5 + $0x238] sm:$0xff]
    %v129 = vld [vmem:[#allocation5 + $0x240] sm:$0xff]
    %v130 = vld [vmem:[#allocation5 + $0x248] sm:$0xff]
    %v131 = vld [vmem:[#allocation5 + $0x250] sm:$0xff]
    %v132 = vld [vmem:[#allocation5 + $0x258] sm:$0xff]
    %v133 = vld [vmem:[#allocation5 + $0x260] sm:$0xff]
    %v134 = vld [vmem:[#allocation5 + $0x268] sm:$0xff]
    %v135 = vld [vmem:[#allocation5 + $0x270] sm:$0xff]
    %v136 = vld [vmem:[#allocation5 + $0x278] sm:$0xff]
    %v137 = vld [vmem:[#allocation5 + $0x280] sm:$0x1]
    %v138 = vld [vmem:[#allocation5 + $0x288] sm:$0x1]
    %v139 = vld [vmem:[#allocation5 + $0x290] sm:$0x1]
    %v140 = vld [vmem:[#allocation5 + $0x298] sm:$0x1]
    %v141 = vld [vmem:[#allocation5 + $0x2a0] sm:$0xff]
    %v142 = vld [vmem:[#allocation5 + $0x2a8] sm:$0xff]
    %v143 = vld [vmem:[#allocation5 + $0x2b0] sm:$0xff]
    %v144 = vld [vmem:[#allocation5 + $0x2b8] sm:$0xff]
    %v145 = vld [vmem:[#allocation5 + $0x2c0] sm:$0xff]
    %v146 = vld [vmem:[#allocation5 + $0x2c8] sm:$0xff]
    %v147 = vld [vmem:[#allocation5 + $0x2d0] sm:$0xff]
    %v148 = vld [vmem:[#allocation5 + $0x2d8] sm:$0xff]
    %v149 = vld [vmem:[#allocation5 + $0x2e0] sm:$0xff]
    %v150 = vld [vmem:[#allocation5 + $0x2e8] sm:$0xff]
    %v151 = vld [vmem:[#allocation5 + $0x2f0] sm:$0xff]
    %v152 = vld [vmem:[#allocation5 + $0x2f8] sm:$0xff]
    %v153 = vld [vmem:[#allocation5 + $0x300] sm:$0xff]
    %v154 = vld [vmem:[#allocation5 + $0x308] sm:$0xff]
    %v155 = vld [vmem:[#allocation5 + $0x310] sm:$0xff]
    %v156 = vld [vmem:[#allocation5 + $0x318] sm:$0xff]
    %v157 = vld [vmem:[#allocation5 + $0x320] sm:$0xff]
    %v158 = vld [vmem:[#allocation5 + $0x328] sm:$0xff]
    %v159 = vld [vmem:[#allocation5 + $0x330] sm:$0xff]
    %v160 = vld [vmem:[#allocation5 + $0x338] sm:$0xff]
    %v161 = vld [vmem:[#allocation5 + $0x340] sm:$0xff]
    %v162 = vld [vmem:[#allocation5 + $0x348] sm:$0xff]
    %v163 = vld [vmem:[#allocation5 + $0x350] sm:$0xff]
    %v164 = vld [vmem:[#allocation5 + $0x358] sm:$0xff]
    %v165 = vld [vmem:[#allocation5 + $0x360] sm:$0xff]
    %v166 = vld [vmem:[#allocation5 + $0x368] sm:$0xff]
    %v167 = vld [vmem:[#allocation5 + $0x370] sm:$0xff]
    %v168 = vld [vmem:[#allocation5 + $0x378] sm:$0xff]
    %v169 = vld [vmem:[#allocation5 + $0x380] sm:$0xff]
    %v170 = vld [vmem:[#allocation5 + $0x388] sm:$0xff]
    %v171 = vld [vmem:[#allocation5 + $0x390] sm:$0xff]
    %v172 = vld [vmem:[#allocation5 + $0x398] sm:$0xff]
    %v173 = vld [vmem:[#allocation5 + $0x3a0] sm:$0x1]
    %v174 = vld [vmem:[#allocation5 + $0x3a8] sm:$0x1]
    %v175 = vld [vmem:[#allocation7] sm:$0xff]
    %v176 = vld [vmem:[#allocation7 + $0x8] sm:$0xff]
    %v177 = vld [vmem:[#allocation7 + $0x10] sm:$0xff]
    %v178 = vld [vmem:[#allocation7 + $0x18] sm:$0xff]
    %v179 = vld [vmem:[#allocation7 + $0x20] sm:$0xff]
    %v180 = vld [vmem:[#allocation7 + $0x28] sm:$0xff]
    %v181 = vld [vmem:[#allocation7 + $0x30] sm:$0xff]
    %v182 = vld [vmem:[#allocation7 + $0x38] sm:$0xff]
    %v183 = vld [vmem:[#allocation7 + $0x40] sm:$0xff]
    %v184 = vld [vmem:[#allocation7 + $0x48] sm:$0xff]
    %v185 = vld [vmem:[#allocation7 + $0x50] sm:$0xff]
    %v186 = vld [vmem:[#allocation7 + $0x58] sm:$0xff]
    %v187 = vld [vmem:[#allocation7 + $0x60] sm:$0xff]
    %v188 = vld [vmem:[#allocation7 + $0x68] sm:$0xff]
    %v189 = vld [vmem:[#allocation7 + $0x70] sm:$0xff]
    %v190 = vld [vmem:[#allocation7 + $0x78] sm:$0xff]
    %v191 = vld [vmem:[#allocation7 + $0x80] sm:$0xff]
    %v192 = vld [vmem:[#allocation7 + $0x88] sm:$0xff]
    %v193 = vld [vmem:[#allocation7 + $0x90] sm:$0xff]
    %v194 = vld [vmem:[#allocation7 + $0x98] sm:$0xff]
    %v195 = vld [vmem:[#allocation7 + $0xa0] sm:$0xff]
    %v196 = vld [vmem:[#allocation7 + $0xa8] sm:$0xff]
    %v197 = vld [vmem:[#allocation7 + $0xb0] sm:$0xff]
    %v198 = vld [vmem:[#allocation7 + $0xb8] sm:$0xff]
    %v199 = vld [vmem:[#allocation7 + $0xc0] sm:$0xff]
    %v200 = vld [vmem:[#allocation7 + $0xc8] sm:$0xff]
    %v201 = vld [vmem:[#allocation7 + $0xd0] sm:$0xff]
    %v202 = vld [vmem:[#allocation7 + $0xd8] sm:$0xff]
    %v203 = vld [vmem:[#allocation7 + $0xe0] sm:$0xff]
    %v204 = vld [vmem:[#allocation7 + $0xe8] sm:$0xff]
    %v205 = vld [vmem:[#allocation7 + $0xf0] sm:$0xff]
    %v206 = vld [vmem:[#allocation7 + $0xf8] sm:$0xff]
    %s207 = scalar_lea.vmem [#allocation7], 256
    %v208 = vld [vmem:[%s207] ss:$8 sm:$0x3]
    %v209 = vlaneseq
    %v210 = vshrl.u32 %v209, 7
    %v211 = vsub.s32 0, %v210
    %v212 = vrot.slane %v137, %v211
    %213 = vmatprep.subr.mxu0 0.0
    %214 = vmatpush1.msra.mxu0 %v57
    %215 = vmatprep.subr.mxu0 0.0
    %216 = vmatpush1.msra.mxu0 %v58
    %217 = vmatprep.subr.mxu0 0.0
    %218 = vmatpush1.msra.mxu0 %v59
    %219 = vmatprep.subr.mxu0 0.0
    %220 = vmatpush1.msra.mxu0 %v60
    %221 = vmatprep.subr.mxu0 0.0
    %222 = vmatpush1.msra.mxu0 %v61
    %223 = vmatprep.subr.mxu0 0.0
    %224 = vmatpush1.msra.mxu0 %v62
    %225 = vmatprep.subr.mxu0 0.0
    %226 = vmatpush1.msra.mxu0 %v63
    %227 = vmatprep.subr.mxu0 0.0
    %228 = vmatpush1.msra.mxu0 %v64
    %229 = vmatprep.subr.mxu0 0.0
    %230 = vmatpush1.msra.mxu0 %v65
    %231 = vmatprep.subr.mxu0 0.0
    %232 = vmatpush1.msra.mxu0 %v66
    %233 = vmatprep.subr.mxu0 0.0
    %234 = vmatpush1.msra.mxu0 %v67
    %235 = vmatprep.subr.mxu0 0.0
    %236 = vmatpush1.msra.mxu0 %v68
    %237 = vmatprep.subr.mxu0 0.0
    %238 = vmatpush1.msra.mxu0 %v69
    %239 = vmatprep.subr.mxu0 0.0
    %240 = vmatpush1.msra.mxu0 %v70
    %241 = vmatprep.subr.mxu0 0.0
    %242 = vmatpush1.msra.mxu0 %v71
    %243 = vmatprep.subr.mxu0 0.0
    %244 = vmatpush1.msra.mxu0 %v72
    %245 = vmatprep.subr.mxu0 0.0
    %246 = vmatpush1.msra.mxu0 %v73
    %247 = vmatprep.subr.mxu0 0.0
    %248 = vmatpush1.msra.mxu0 %v74
    %249 = vmatprep.subr.mxu0 0.0
    %250 = vmatpush1.msra.mxu0 %v75
    %251 = vmatprep.subr.mxu0 0.0
    %252 = vmatpush1.msra.mxu0 %v76
    %253 = vmatprep.subr.mxu0 0.0
    %254 = vmatpush1.msra.mxu0 %v77
    %255 = vmatprep.subr.mxu0 0.0
    %256 = vmatpush1.msra.mxu0 %v78
    %257 = vmatprep.subr.mxu0 0.0
    %258 = vmatpush1.msra.mxu0 %v79
    %259 = vmatprep.subr.mxu0 0.0
    %260 = vmatpush1.msra.mxu0 %v80
    %261 = vmatprep.subr.mxu0 0.0
    %262 = vmatpush1.msra.mxu0 %v81
    %263 = vmatprep.subr.mxu0 0.0
    %264 = vmatpush1.msra.mxu0 %v82
    %265 = vmatprep.subr.mxu0 0.0
    %266 = vmatpush1.msra.mxu0 %v83
    %267 = vmatprep.subr.mxu0 0.0
    %268 = vmatpush1.msra.mxu0 %v84
    %269 = vmatprep.subr.mxu0 0.0
    %270 = vmatpush1.msra.mxu0 %v85
    %271 = vmatprep.subr.mxu0 0.0
    %272 = vmatpush1.msra.mxu0 %v86
    %273 = vmatprep.subr.mxu0 0.0
    %274 = vmatpush1.msra.mxu0 %v87
    %275 = vmatprep.subr.mxu0 0.0
    %276 = vmatpush1.msra.mxu0 %v88
    %277 = vmatprep.mubr.f32.mxu0 %v55
    %278 = vmatmul.mubr.f32.gmra.mrb[0].mxu0 %v54
    %v279 = vpop.f32.mrb[0].mxu0
    %v280 = vadd.f32 %v212, %v279
    %v281 = vpop.f32.mrb[0].mxu0
    %282 = vdwg.mxu0
    %v283 = vmax.f32 %v280, 0.0
    %v284 = vlaneseq
    %v285 = vshrl.u32 %v284, 7
    %v286 = vsub.s32 0, %v285
    %v287 = vrot.slane %v138, %v286
    %288 = vmatprep.subr.mxu0 0.0
    %289 = vmatpush1.msra.mxu0 %v89
    %290 = vmatprep.subr.mxu0 0.0
    %291 = vmatpush1.msra.mxu0 %v90
    %292 = vmatprep.subr.mxu0 0.0
    %293 = vmatpush1.msra.mxu0 %v91
    %294 = vmatprep.subr.mxu0 0.0
    %295 = vmatpush1.msra.mxu0 %v92
    %296 = vmatprep.subr.mxu0 0.0
    %297 = vmatpush1.msra.mxu0 %v93
    %298 = vmatprep.subr.mxu0 0.0
    %299 = vmatpush1.msra.mxu0 %v94
    %300 = vmatprep.subr.mxu0 0.0
    %301 = vmatpush1.msra.mxu0 %v95
    %302 = vmatprep.subr.mxu0 0.0
    %303 = vmatpush1.msra.mxu0 %v96
    %304 = vmatprep.subr.mxu0 0.0
    %305 = vmatpush1.msra.mxu0 %v97
    %306 = vmatprep.subr.mxu0 0.0
    %307 = vmatpush1.msra.mxu0 %v98
    %308 = vmatprep.subr.mxu0 0.0
    %309 = vmatpush1.msra.mxu0 %v99
    %310 = vmatprep.subr.mxu0 0.0
    %311 = vmatpush1.msra.mxu0 %v100
    %312 = vmatprep.subr.mxu0 0.0
    %313 = vmatpush1.msra.mxu0 %v101
    %314 = vmatprep.subr.mxu0 0.0
    %315 = vmatpush1.msra.mxu0 %v102
    %316 = vmatprep.subr.mxu0 0.0
    %317 = vmatpush1.msra.mxu0 %v103
    %318 = vmatprep.subr.mxu0 0.0
    %319 = vmatpush1.msra.mxu0 %v104
    %320 = vmatprep.subr.mxu0 0.0
    %321 = vmatpush1.msra.mxu0 0.0
    %322 = vmatprep.subr.mxu0 0.0
    %323 = vmatpush1.msra.mxu0 0.0
    %324 = vmatprep.subr.mxu0 0.0
    %325 = vmatpush1.msra.mxu0 0.0
    %326 = vmatprep.subr.mxu0 0.0
    %327 = vmatpush1.msra.mxu0 0.0
    %328 = vmatprep.subr.mxu0 0.0
    %329 = vmatpush1.msra.mxu0 0.0
    %330 = vmatprep.subr.mxu0 0.0
    %331 = vmatpush1.msra.mxu0 0.0
    %332 = vmatprep.subr.mxu0 0.0
    %333 = vmatpush1.msra.mxu0 0.0
    %334 = vmatprep.subr.mxu0 0.0
    %335 = vmatpush1.msra.mxu0 0.0
    %336 = vmatprep.subr.mxu0 0.0
    %337 = vmatpush1.msra.mxu0 0.0
    %338 = vmatprep.subr.mxu0 0.0
    %339 = vmatpush1.msra.mxu0 0.0
    %340 = vmatprep.subr.mxu0 0.0
    %341 = vmatpush1.msra.mxu0 0.0
    %342 = vmatprep.subr.mxu0 0.0
    %343 = vmatpush1.msra.mxu0 0.0
    %344 = vmatprep.subr.mxu0 0.0
    %345 = vmatpush1.msra.mxu0 0.0
    %346 = vmatprep.subr.mxu0 0.0
    %347 = vmatpush1.msra.mxu0 0.0
    %348 = vmatprep.subr.mxu0 0.0
    %349 = vmatpush1.msra.mxu0 0.0
    %350 = vmatprep.subr.mxu0 0.0
    %351 = vmatpush1.msra.mxu0 0.0
    %352 = vmatprep.mubr.f32.mxu0 0.0
    %353 = vmatmul.mubr.f32.gmra.mrb[0].mxu0 %v283
    %v354 = vpop.f32.mrb[0].mxu0
    %v355 = vadd.f32 %v287, %v354
    %v356 = vpop.f32.mrb[0].mxu0
    %357 = vdwg.mxu0
    %v358 = vmax.f32 %v355, 0.0
    %v359 = vlaneseq
    %v360 = vshrl.u32 %v359, 7
    %v361 = vsub.s32 0, %v360
    %v362 = vrot.slane %v139, %v361
    %363 = vmatprep.subr.mxu0 0.0
    %364 = vmatpush1.msra.mxu0 %v105
    %365 = vmatprep.subr.mxu0 0.0
    %366 = vmatpush1.msra.mxu0 %v106
    %367 = vmatprep.subr.mxu0 0.0
    %368 = vmatpush1.msra.mxu0 %v107
    %369 = vmatprep.subr.mxu0 0.0
    %370 = vmatpush1.msra.mxu0 %v108
    %371 = vmatprep.subr.mxu0 0.0
    %372 = vmatpush1.msra.mxu0 %v109
    %373 = vmatprep.subr.mxu0 0.0
    %374 = vmatpush1.msra.mxu0 %v110
    %375 = vmatprep.subr.mxu0 0.0
    %376 = vmatpush1.msra.mxu0 %v111
    %377 = vmatprep.subr.mxu0 0.0
    %378 = vmatpush1.msra.mxu0 %v112
    %379 = vmatprep.subr.mxu0 0.0
    %380 = vmatpush1.msra.mxu0 %v113
    %381 = vmatprep.subr.mxu0 0.0
    %382 = vmatpush1.msra.mxu0 %v114
    %383 = vmatprep.subr.mxu0 0.0
    %384 = vmatpush1.msra.mxu0 %v115
    %385 = vmatprep.subr.mxu0 0.0
    %386 = vmatpush1.msra.mxu0 %v116
    %387 = vmatprep.subr.mxu0 0.0
    %388 = vmatpush1.msra.mxu0 %v117
    %389 = vmatprep.subr.mxu0 0.0
    %390 = vmatpush1.msra.mxu0 %v118
    %391 = vmatprep.subr.mxu0 0.0
    %392 = vmatpush1.msra.mxu0 %v119
    %393 = vmatprep.subr.mxu0 0.0
    %394 = vmatpush1.msra.mxu0 %v120
    %395 = vmatprep.subr.mxu0 0.0
    %396 = vmatpush1.msra.mxu0 0.0
    %397 = vmatprep.subr.mxu0 0.0
    %398 = vmatpush1.msra.mxu0 0.0
    %399 = vmatprep.subr.mxu0 0.0
    %400 = vmatpush1.msra.mxu0 0.0
    %401 = vmatprep.subr.mxu0 0.0
    %402 = vmatpush1.msra.mxu0 0.0
    %403 = vmatprep.subr.mxu0 0.0
    %404 = vmatpush1.msra.mxu0 0.0
    %405 = vmatprep.subr.mxu0 0.0
    %406 = vmatpush1.msra.mxu0 0.0
    %407 = vmatprep.subr.mxu0 0.0
    %408 = vmatpush1.msra.mxu0 0.0
    %409 = vmatprep.subr.mxu0 0.0
    %410 = vmatpush1.msra.mxu0 0.0
    %411 = vmatprep.subr.mxu0 0.0
    %412 = vmatpush1.msra.mxu0 0.0
    %413 = vmatprep.subr.mxu0 0.0
    %414 = vmatpush1.msra.mxu0 0.0
    %415 = vmatprep.subr.mxu0 0.0
    %416 = vmatpush1.msra.mxu0 0.0
    %417 = vmatprep.subr.mxu0 0.0
    %418 = vmatpush1.msra.mxu0 0.0
    %419 = vmatprep.subr.mxu0 0.0
    %420 = vmatpush1.msra.mxu0 0.0
    %421 = vmatprep.subr.mxu0 0.0
    %422 = vmatpush1.msra.mxu0 0.0
    %423 = vmatprep.subr.mxu0 0.0
    %424 = vmatpush1.msra.mxu0 0.0
    %425 = vmatprep.subr.mxu0 0.0
    %426 = vmatpush1.msra.mxu0 0.0
    %427 = vmatprep.mubr.f32.mxu0 0.0
    %428 = vmatmul.mubr.f32.gmra.mrb[0].mxu0 %v358
    %v429 = vpop.f32.mrb[0].mxu0
    %v430 = vadd.f32 %v362, %v429
    %v431 = vpop.f32.mrb[0].mxu0
    %432 = vdwg.mxu0
    %v433 = vlaneseq
    %v434 = vshrl.u32 %v433, 7
    %v435 = vsub.s32 0, %v434
    %v436 = vrot.slane %v140, %v435
    %437 = vmatprep.subr.mxu0 0.0
    %438 = vmatpush1.msra.mxu0 %v121
    %439 = vmatprep.subr.mxu0 0.0
    %440 = vmatpush1.msra.mxu0 %v122
    %441 = vmatprep.subr.mxu0 0.0
    %442 = vmatpush1.msra.mxu0 %v123
    %443 = vmatprep.subr.mxu0 0.0
    %444 = vmatpush1.msra.mxu0 %v124
    %445 = vmatprep.subr.mxu0 0.0
    %446 = vmatpush1.msra.mxu0 %v125
    %447 = vmatprep.subr.mxu0 0.0
    %448 = vmatpush1.msra.mxu0 %v126
    %449 = vmatprep.subr.mxu0 0.0
    %450 = vmatpush1.msra.mxu0 %v127
    %451 = vmatprep.subr.mxu0 0.0
    %452 = vmatpush1.msra.mxu0 %v128
    %453 = vmatprep.subr.mxu0 0.0
    %454 = vmatpush1.msra.mxu0 %v129
    %455 = vmatprep.subr.mxu0 0.0
    %456 = vmatpush1.msra.mxu0 %v130
    %457 = vmatprep.subr.mxu0 0.0
    %458 = vmatpush1.msra.mxu0 %v131
    %459 = vmatprep.subr.mxu0 0.0
    %460 = vmatpush1.msra.mxu0 %v132
    %461 = vmatprep.subr.mxu0 0.0
    %462 = vmatpush1.msra.mxu0 %v133
    %463 = vmatprep.subr.mxu0 0.0
    %464 = vmatpush1.msra.mxu0 %v134
    %465 = vmatprep.subr.mxu0 0.0
    %466 = vmatpush1.msra.mxu0 %v135
    %467 = vmatprep.subr.mxu0 0.0
    %468 = vmatpush1.msra.mxu0 %v136
    %469 = vmatprep.subr.mxu0 0.0
    %470 = vmatpush1.msra.mxu0 0.0
    %471 = vmatprep.subr.mxu0 0.0
    %472 = vmatpush1.msra.mxu0 0.0
    %473 = vmatprep.subr.mxu0 0.0
    %474 = vmatpush1.msra.mxu0 0.0
    %475 = vmatprep.subr.mxu0 0.0
    %476 = vmatpush1.msra.mxu0 0.0
    %477 = vmatprep.subr.mxu0 0.0
    %478 = vmatpush1.msra.mxu0 0.0
    %479 = vmatprep.subr.mxu0 0.0
    %480 = vmatpush1.msra.mxu0 0.0
    %481 = vmatprep.subr.mxu0 0.0
    %482 = vmatpush1.msra.mxu0 0.0
    %483 = vmatprep.subr.mxu0 0.0
    %484 = vmatpush1.msra.mxu0 0.0
    %485 = vmatprep.subr.mxu0 0.0
    %486 = vmatpush1.msra.mxu0 0.0
    %487 = vmatprep.subr.mxu0 0.0
    %488 = vmatpush1.msra.mxu0 0.0
    %489 = vmatprep.subr.mxu0 0.0
    %490 = vmatpush1.msra.mxu0 0.0
    %491 = vmatprep.subr.mxu0 0.0
    %492 = vmatpush1.msra.mxu0 0.0
    %493 = vmatprep.subr.mxu0 0.0
    %494 = vmatpush1.msra.mxu0 0.0
    %495 = vmatprep.subr.mxu0 0.0
    %496 = vmatpush1.msra.mxu0 0.0
    %497 = vmatprep.subr.mxu0 0.0
    %498 = vmatpush1.msra.mxu0 0.0
    %499 = vmatprep.subr.mxu0 0.0
    %500 = vmatpush1.msra.mxu0 0.0
    %501 = vmatprep.mubr.f32.mxu0 0.0
    %502 = vmatmul.mubr.f32.gmra.mrb[0].mxu0 %v358
    %v503 = vpop.f32.mrb[0].mxu0
    %v504 = vadd.f32 %v436, %v503
    %v505 = vpop.f32.mrb[0].mxu0
    %506 = vdwg.mxu0
    %v507 = vmul.f32 %v504, 1.442695
    %v508 = vpow.pop %v507
    %v509 = vmul.f32 %v508, %v56
    %v510 = vadd.f32 %v430, %v509
    %v511 = vlaneseq
    %v512 = vshrl.u32 %v511, 7
    %v513 = vsub.s32 0, %v512
    %v514 = vrot.slane %v173, %v513
    %515 = vmatprep.subr.mxu0 0.0
    %516 = vmatpush1.msra.mxu0 %v141
    %517 = vmatprep.subr.mxu0 0.0
    %518 = vmatpush1.msra.mxu0 %v142
    %519 = vmatprep.subr.mxu0 0.0
    %520 = vmatpush1.msra.mxu0 %v143
    %521 = vmatprep.subr.mxu0 0.0
    %522 = vmatpush1.msra.mxu0 %v144
    %523 = vmatprep.subr.mxu0 0.0
    %524 = vmatpush1.msra.mxu0 %v145
    %525 = vmatprep.subr.mxu0 0.0
    %526 = vmatpush1.msra.mxu0 %v146
    %527 = vmatprep.subr.mxu0 0.0
    %528 = vmatpush1.msra.mxu0 %v147
    %529 = vmatprep.subr.mxu0 0.0
    %530 = vmatpush1.msra.mxu0 %v148
    %531 = vmatprep.subr.mxu0 0.0
    %532 = vmatpush1.msra.mxu0 %v149
    %533 = vmatprep.subr.mxu0 0.0
    %534 = vmatpush1.msra.mxu0 %v150
    %535 = vmatprep.subr.mxu0 0.0
    %536 = vmatpush1.msra.mxu0 %v151
    %537 = vmatprep.subr.mxu0 0.0
    %538 = vmatpush1.msra.mxu0 %v152
    %539 = vmatprep.subr.mxu0 0.0
    %540 = vmatpush1.msra.mxu0 %v153
    %541 = vmatprep.subr.mxu0 0.0
    %542 = vmatpush1.msra.mxu0 %v154
    %543 = vmatprep.subr.mxu0 0.0
    %544 = vmatpush1.msra.mxu0 %v155
    %545 = vmatprep.subr.mxu0 0.0
    %546 = vmatpush1.msra.mxu0 %v156
    %547 = vmatprep.subr.mxu0 0.0
    %548 = vmatpush1.msra.mxu0 0.0
    %549 = vmatprep.subr.mxu0 0.0
    %550 = vmatpush1.msra.mxu0 0.0
    %551 = vmatprep.subr.mxu0 0.0
    %552 = vmatpush1.msra.mxu0 0.0
    %553 = vmatprep.subr.mxu0 0.0
    %554 = vmatpush1.msra.mxu0 0.0
    %555 = vmatprep.subr.mxu0 0.0
    %556 = vmatpush1.msra.mxu0 0.0
    %557 = vmatprep.subr.mxu0 0.0
    %558 = vmatpush1.msra.mxu0 0.0
    %559 = vmatprep.subr.mxu0 0.0
    %560 = vmatpush1.msra.mxu0 0.0
    %561 = vmatprep.subr.mxu0 0.0
    %562 = vmatpush1.msra.mxu0 0.0
    %563 = vmatprep.subr.mxu0 0.0
    %564 = vmatpush1.msra.mxu0 0.0
    %565 = vmatprep.subr.mxu0 0.0
    %566 = vmatpush1.msra.mxu0 0.0
    %567 = vmatprep.subr.mxu0 0.0
    %568 = vmatpush1.msra.mxu0 0.0
    %569 = vmatprep.subr.mxu0 0.0
    %570 = vmatpush1.msra.mxu0 0.0
    %571 = vmatprep.subr.mxu0 0.0
    %572 = vmatpush1.msra.mxu0 0.0
    %573 = vmatprep.subr.mxu0 0.0
    %574 = vmatpush1.msra.mxu0 0.0
    %575 = vmatprep.subr.mxu0 0.0
    %576 = vmatpush1.msra.mxu0 0.0
    %577 = vmatprep.subr.mxu0 0.0
    %578 = vmatpush1.msra.mxu0 0.0
    %579 = vmatprep.mubr.f32.mxu0 0.0
    %580 = vmatmul.mubr.f32.gmra.mrb[0].mxu0 %v510
    %v581 = vpop.f32.mrb[0].mxu0
    %v582 = vadd.f32 %v514, %v581
    %v583 = vpop.f32.mrb[0].mxu0
    %584 = vdwg.mxu0
    %v585 = vmax.f32 %v582, 0.0
    %v586 = vlaneseq
    %v587 = vshrl.u32 %v586, 7
    %v588 = vsub.s32 0, %v587
    %v589 = vrot.slane %v174, %v588
    %590 = vmatprep.subr.mxu0 0.0
    %591 = vmatpush1.msra.mxu0 %v157
    %592 = vmatprep.subr.mxu0 0.0
    %593 = vmatpush1.msra.mxu0 %v158
    %594 = vmatprep.subr.mxu0 0.0
    %595 = vmatpush1.msra.mxu0 %v159
    %596 = vmatprep.subr.mxu0 0.0
    %597 = vmatpush1.msra.mxu0 %v160
    %598 = vmatprep.subr.mxu0 0.0
    %599 = vmatpush1.msra.mxu0 %v161
    %600 = vmatprep.subr.mxu0 0.0
    %601 = vmatpush1.msra.mxu0 %v162
    %602 = vmatprep.subr.mxu0 0.0
    %603 = vmatpush1.msra.mxu0 %v163
    %604 = vmatprep.subr.mxu0 0.0
    %605 = vmatpush1.msra.mxu0 %v164
    %606 = vmatprep.subr.mxu0 0.0
    %607 = vmatpush1.msra.mxu0 %v165
    %608 = vmatprep.subr.mxu0 0.0
    %609 = vmatpush1.msra.mxu0 %v166
    %610 = vmatprep.subr.mxu0 0.0
    %611 = vmatpush1.msra.mxu0 %v167
    %612 = vmatprep.subr.mxu0 0.0
    %613 = vmatpush1.msra.mxu0 %v168
    %614 = vmatprep.subr.mxu0 0.0
    %615 = vmatpush1.msra.mxu0 %v169
    %616 = vmatprep.subr.mxu0 0.0
    %617 = vmatpush1.msra.mxu0 %v170
    %618 = vmatprep.subr.mxu0 0.0
    %619 = vmatpush1.msra.mxu0 %v171
    %620 = vmatprep.subr.mxu0 0.0
    %621 = vmatpush1.msra.mxu0 %v172
    %622 = vmatprep.subr.mxu0 0.0
    %623 = vmatpush1.msra.mxu0 0.0
    %624 = vmatprep.subr.mxu0 0.0
    %625 = vmatpush1.msra.mxu0 0.0
    %626 = vmatprep.subr.mxu0 0.0
    %627 = vmatpush1.msra.mxu0 0.0
    %628 = vmatprep.subr.mxu0 0.0
    %629 = vmatpush1.msra.mxu0 0.0
    %630 = vmatprep.subr.mxu0 0.0
    %631 = vmatpush1.msra.mxu0 0.0
    %632 = vmatprep.subr.mxu0 0.0
    %633 = vmatpush1.msra.mxu0 0.0
    %634 = vmatprep.subr.mxu0 0.0
    %635 = vmatpush1.msra.mxu0 0.0
    %636 = vmatprep.subr.mxu0 0.0
    %637 = vmatpush1.msra.mxu0 0.0
    %638 = vmatprep.subr.mxu0 0.0
    %639 = vmatpush1.msra.mxu0 0.0
    %640 = vmatprep.subr.mxu0 0.0
    %641 = vmatpush1.msra.mxu0 0.0
    %642 = vmatprep.subr.mxu0 0.0
    %643 = vmatpush1.msra.mxu0 0.0
    %644 = vmatprep.subr.mxu0 0.0
    %645 = vmatpush1.msra.mxu0 0.0
    %646 = vmatprep.subr.mxu0 0.0
    %647 = vmatpush1.msra.mxu0 0.0
    %648 = vmatprep.subr.mxu0 0.0
    %649 = vmatpush1.msra.mxu0 0.0
    %650 = vmatprep.subr.mxu0 0.0
    %651 = vmatpush1.msra.mxu0 0.0
    %652 = vmatprep.subr.mxu0 0.0
    %653 = vmatpush1.msra.mxu0 0.0
    %654 = vmatprep.mubr.f32.mxu0 0.0
    %655 = vmatmul.mubr.f32.gmra.mrb[0].mxu0 %v585
    %v656 = vpop.f32.mrb[0].mxu0
    %v657 = vadd.f32 %v589, %v656
    %v658 = vpop.f32.mrb[0].mxu0
    %659 = vdwg.mxu0
    %v660 = vmax.f32 %v657, 0.0
    %v662 = vlaneseq
    %v663 = vshrl.u32 %v662, 7
    %v664 = vsub.s32 0, %v663
    %v665 = vrot.slane %v208, %v664
    %v666 = vlaneseq
    %v667 = vshrl.u32 %v666, 7
    %v668 = vsub.s32 1, %v667
    %v669 = vrot.slane %v208, %v668
    %672 = vmatprep.subr.mxu0 %v176
    %673 = vmatpush1.msra.mxu0 %v175
    %674 = vmatprep.subr.mxu0 %v178
    %675 = vmatpush1.msra.mxu0 %v177
    %676 = vmatprep.subr.mxu0 %v180
    %677 = vmatpush1.msra.mxu0 %v179
    %678 = vmatprep.subr.mxu0 %v182
    %679 = vmatpush1.msra.mxu0 %v181
    %680 = vmatprep.subr.mxu0 %v184
    %681 = vmatpush1.msra.mxu0 %v183
    %682 = vmatprep.subr.mxu0 %v186
    %683 = vmatpush1.msra.mxu0 %v185
    %684 = vmatprep.subr.mxu0 %v188
    %685 = vmatpush1.msra.mxu0 %v187
    %686 = vmatprep.subr.mxu0 %v190
    %687 = vmatpush1.msra.mxu0 %v189
    %688 = vmatprep.subr.mxu0 %v192
    %689 = vmatpush1.msra.mxu0 %v191
    %690 = vmatprep.subr.mxu0 %v194
    %691 = vmatpush1.msra.mxu0 %v193
    %692 = vmatprep.subr.mxu0 %v196
    %693 = vmatpush1.msra.mxu0 %v195
    %694 = vmatprep.subr.mxu0 %v198
    %695 = vmatpush1.msra.mxu0 %v197
    %696 = vmatprep.subr.mxu0 %v200
    %697 = vmatpush1.msra.mxu0 %v199
    %698 = vmatprep.subr.mxu0 %v202
    %699 = vmatpush1.msra.mxu0 %v201
    %700 = vmatprep.subr.mxu0 %v204
    %701 = vmatpush1.msra.mxu0 %v203
    %702 = vmatprep.subr.mxu0 %v206
    %703 = vmatpush1.msra.mxu0 %v205
    %704 = vmatprep.subr.mxu0 0.0
    %705 = vmatpush1.msra.mxu0 0.0
    %706 = vmatprep.subr.mxu0 0.0
    %707 = vmatpush1.msra.mxu0 0.0
    %708 = vmatprep.subr.mxu0 0.0
    %709 = vmatpush1.msra.mxu0 0.0
    %710 = vmatprep.subr.mxu0 0.0
    %711 = vmatpush1.msra.mxu0 0.0
    %712 = vmatprep.subr.mxu0 0.0
    %713 = vmatpush1.msra.mxu0 0.0
    %714 = vmatprep.subr.mxu0 0.0
    %715 = vmatpush1.msra.mxu0 0.0
    %716 = vmatprep.subr.mxu0 0.0
    %717 = vmatpush1.msra.mxu0 0.0
    %718 = vmatprep.subr.mxu0 0.0
    %719 = vmatpush1.msra.mxu0 0.0
    %720 = vmatprep.subr.mxu0 0.0
    %721 = vmatpush1.msra.mxu0 0.0
    %722 = vmatprep.subr.mxu0 0.0
    %723 = vmatpush1.msra.mxu0 0.0
    %724 = vmatprep.subr.mxu0 0.0
    %725 = vmatpush1.msra.mxu0 0.0
    %726 = vmatprep.subr.mxu0 0.0
    %727 = vmatpush1.msra.mxu0 0.0
    %728 = vmatprep.subr.mxu0 0.0
    %729 = vmatpush1.msra.mxu0 0.0
    %730 = vmatprep.subr.mxu0 0.0
    %731 = vmatpush1.msra.mxu0 0.0
    %732 = vmatprep.subr.mxu0 0.0
    %733 = vmatpush1.msra.mxu0 0.0
    %734 = vmatprep.subr.mxu0 0.0
    %735 = vmatpush1.msra.mxu0 0.0
    %736 = vmatprep.mubr.f32.mxu0 0.0
    %737 = vmatmul.mubr.f32.gmra.mrb[0].mxu0 %v660
    %v738 = vpop.f32.mrb[0].mxu0
    %v739 = vadd.f32 %v665, %v738
    %v740 = vpop.f32.mrb[0].mxu0
    %v741 = vadd.f32 %v669, %v740
    %742 = vdwg.mxu0
    %v743 = vmul.f32 %v54, %v739
    %v744 = vmul.f32 %v55, %v741
    %v745 = vmax.f32 %v739, 0.0
    %v746 = vmax.f32 %v741, 0.0
    %v747 = vsub.f32 0.0, %v739
    %v748 = vsub.f32 0.0, %v741
    %vm749 = vcmp.ne.f32.partialorder %v747, %v747
    %vm750 = vcmp.ne.f32.partialorder %v748, %v748
    %v751 = vadd.f32 %v739, 0.0
    %v752 = vadd.f32 %v741, 0.0
    %v753 = vand.u32 2147483647, %v747
    %v754 = vand.u32 2147483647, %v748
    %v755 = vsub.f32 0.0, %v753
    %v756 = vsub.f32 0.0, %v754
    %v757 = vmul.f32 %v755, 1.442695
    %v758 = vpow.pop %v757
    %v759 = vmul.f32 %v756, 1.442695
    %v760 = vpow.pop %v759
    %v761 = vadd.f32 %v758, 1.0
    %v762 = vlog2.pop %v761
    %v763 = vmul.f32 %v762, 0.6931472
    %v764 = vmul.f32 -0.5, %v758
    %v765 = vadd.f32 %v764, 1.0
    %v766 = vmul.f32 %v765, %v758
    %v767 = vand.u32 2147483647, %v758
    %vm768 = vcmp.lt.f32.partialorder %v767, 0.0004427343
    %v769 = vsel %vm768, %v766, %v763
    %v770 = vadd.f32 %v760, 1.0
    %v771 = vlog2.pop %v770
    %v772 = vmul.f32 %v771, 0.6931472
    %v773 = vmul.f32 -0.5, %v760
    %v774 = vadd.f32 %v773, 1.0
    %v775 = vmul.f32 %v774, %v760
    %v776 = vand.u32 2147483647, %v760
    %vm777 = vcmp.lt.f32.partialorder %v776, 0.0004427343
    %v778 = vsel %vm777, %v775, %v772
    %v779 = vadd.f32 %v745, %v769
    %v780 = vadd.f32 %v746, %v778
    %v781 = vsel %vm749, %v751, %v779
    %v782 = vsel %vm750, %v752, %v780
    %v783 = vsub.f32 %v743, %v781
    %v784 = vsub.f32 %v744, %v782
    %v785 = vadd.f32 %v783, %v784
    %786 = vadd.xlane.f32.xlu0 %v785
    %v787 = vpop.xlane.xlu0 %786
    %v788 = vrot.slane %v787, 4
    %v789 = vadd.f32 %v787, %v788
    %v790 = vrot.slane %v789, 2
    %v791 = vadd.f32 %v789, %v790
    %v792 = vrot.slane %v791, 1
    %v793 = vadd.f32 %v791, %v792
    %s794 = vtos %v793
    %v795 = vmul.f32 %v56, 0.5
    %v796 = vmul.f32 %v795, %v56
    %v797 = vmul.f32 %v510, 0.5
    %v798 = vmul.f32 %v797, %v510
    %v799 = vsub.f32 %v796, %v798
    %v800 = vadd.f32 %v799, %v504
    %801 = vadd.xlane.f32.xlu0 %v800
    %v802 = vpop.xlane.xlu0 %801
    %v803 = vrot.slane %v802, 4
    %v804 = vadd.f32 %v802, %v803
    %v805 = vrot.slane %v804, 2
    %v806 = vadd.f32 %v804, %v805
    %v807 = vrot.slane %v806, 1
    %v808 = vadd.f32 %v806, %v807
    %s809 = vtos %v808
    %s810 = sadd.f32 %s794, %s809
    %s811 = ssub.f32 0.0, %s810
    %s812 = smul.f32 %s811, 0.125
    %s813 = scalar_lea.smem [#allocation8], 0
    %814 = sst [smem:[%s813]] %s812
    // Predicated region
    $region26: #{tpu_custom_call.1} parent=1 // pred_check
      _
    $region27: #{tpu_custom_call.1} parent=1 // pred_check_branch
      %816 = sbr.rel (0) target = $region29
    $region28: #{tpu_custom_call.1} parent=1 // pred_region
      %s818 = ssub.s32 16, 16
      %819 = vsyncadd [#allocation4], %s818
      %822 = dma.smem_to_hbm [#allocation8], 16, %s3, [#allocation4]
    $region29: #{tpu_custom_call.1} parent=1 // pred_fallthru
      _
    // Predicated region
    $region30: #{tpu_custom_call.1} parent=1 // pred_check
      _
    $region31: #{tpu_custom_call.1} parent=1 // pred_check_branch
      %824 = sbr.rel (0) target = $region33
    $region32: #{tpu_custom_call.1} parent=1 // pred_region
      %825 = dma.done [#allocation4], 16
    $region33: #{tpu_custom_call.1} parent=1 // pred_fallthru
      _
    %826 = sfence
    %827 = vsyncpa [#allocation3], 1
    %828 = vsyncpa [#allocation6], 1
    %829 = vsyncpa [#allocation4], 1

</llo_original>
